<compile_context>
chip_gen: v6e
topology: v6e:2x2x1
jax: 0.10.0
libtpu: 0.0.40
codegen_flags: <defaults>
</compile_context>

<pallas_src>
import jax
import jax.numpy as jnp
from jax.experimental import pallas as pl
from jax.experimental.pallas import tpu as pltpu


def _round_up(x, m):
    return ((x + m - 1) // m) * m


def _chip_hints():
    """Returns (streamed_tile_budget_bytes, vmem_physical_bytes, multicore)."""
    vmem_phys = 64 << 20  # conservative fallback (v7x per-TC VMEM)
    try:
        vmem_phys = int(getattr(pltpu.get_tpu_info(), "vmem_capacity_bytes",
                                vmem_phys))
    except Exception:
        pass
    kind = ""
    try:
        kind = jax.devices()[0].device_kind.lower()
    except Exception:
        pass
    multicore = "v7" in kind  # v7x: 2 TensorCores per chip
    if ("v5e" in kind) or ("v5 lite" in kind) or ("v5lite" in kind):
        budget = 12 << 20   # v5e: 16 MiB scoped default, leave headroom
    elif vmem_phys <= (64 << 20):
        budget = 20 << 20   # v7x-like: only 64 MiB physical VMEM
    else:
        budget = 24 << 20   # v6e-like: 128 MiB physical, 32 MiB scoped default
    return budget, vmem_phys, multicore


def _make_gqa_kernel(dims, use_mxu):
    """dims = (F, enc_dims...) of the concatenated key input; static."""
    n_in = len(dims)
    offs = []
    off = 0
    for d in dims:
        offs.append(off)
        off += d

    def kernel(*refs):
        x_refs = refs[:n_in]          # seq, then the optional pos/time encodings
        w_ref = refs[n_in]            # [1, Din] fused weight vector (W^T q)
        o_ref = refs[n_in + 1]        # [Bt, F]

        seq = x_refs[0][...]          # [Bt, L, F]

        # scores[b, l] = sum_d k_seq[b, l, d] * w_q[d]
        # VPU elementwise multiply + lane reduction (exact f32, no M=1 matvec).
        def contrib(x, seg_off, d):
            wseg = w_ref[:, seg_off:seg_off + d].reshape(1, 1, d)  # static slice
            return jnp.sum(x * wseg, axis=-1)                      # [Bt, L]

        scores = contrib(seq, offs[0], dims[0])
        for i in range(1, n_in):
            scores = scores + contrib(x_refs[i][...], offs[i], dims[i])
        # NOTE: (bias . query) shifts every score equally; softmax is
        # shift-invariant, so it cancels exactly (Identity activation only).

        # Numerically stable softmax over L (lane axis); exact division —
        # the denominator tile is [Bt, 1], cost is negligible.
        m = jnp.max(scores, axis=-1, keepdims=True)                # [Bt, 1]
        e = jnp.exp(scores - m)                                    # [Bt, L]
        attn = e / jnp.sum(e, axis=-1, keepdims=True)              # [Bt, L]

        if use_mxu:
            # Large L and F: batched vec-mat is worth the MXU.
            acc = jax.lax.dot_general(
                attn, seq,
                dimension_numbers=(((1,), (1,)), ((0,), (0,))),
                preferred_element_type=jnp.float32,
                precision=jax.lax.Precision.HIGHEST)               # [Bt, F]
        else:
            # Small L/F: elementwise multiply + sublane reduce (VPU/XLU).
            acc = jnp.sum(attn[:, :, None] * seq, axis=1)          # [Bt, F]

        o_ref[...] = acc.astype(o_ref.dtype)

    return kernel


def global_query_attention(seq, pos_enc, time_enc, weight, bias, query,
                           *, block_b=None):
    """seq: [B,L,F]; pos_enc/time_enc: [B,L,E] or None;
    weight: [dk, Din] (torch nn.Linear layout); bias: [dk]; query: [dk].

    Matches GlobalQueryAttention.forward with the default Identity activation.
    The algebraic fusion scores = k_seq @ (W^T q) (with bias.q dropped via
    softmax shift-invariance) is exact ONLY for a linear key projection.
    """
    B, L, F = seq.shape
    encs = [e for e in (pos_enc, time_enc) if e is not None]
    dims = tuple([F] + [int(e.shape[-1]) for e in encs])
    Din = sum(dims)
    dk = weight.shape[0]
    assert weight.shape == (dk, Din), "weight shape mismatch with inputs"
    assert query.shape == (dk,), "query shape mismatch"
    del bias  # uniform score shift; softmax cancels it exactly.

    # Exact (elementwise f32, no MXU / no precision loss) fused vector W^T q.
    w_q = jnp.sum(weight.astype(jnp.float32) * query.astype(jnp.float32)[:, None],
                  axis=0).reshape(1, Din)

    itemsize = jnp.dtype(seq.dtype).itemsize
    budget, vmem_phys, multicore = _chip_hints()
    per_row = L * Din * itemsize                   # streamed bytes per batch row

    if block_b is None:
        bt = max(1, budget // max(1, 2 * per_row))  # 2x: double-buffered inputs
        if bt >= B:
            if multicore and B >= 16:
                # Multi-TC chip: split the batch across the 2 TensorCores.
                bt = _round_up(pl.cdiv(B, 2), 8)
            else:
                bt = B                               # single block, grid = 1
        else:
            # Sublane-dense output tiles want Bt % 8 == 0 (or Bt == padded B).
            # For extremely large L*Din a production kernel would also tile L.
            bt = max(8, (bt // 8) * 8)
    else:
        bt = int(block_b)
        assert bt == B or bt % 8 == 0, "block_b must equal B or be a multiple of 8"
    Bt = bt
    B_pad = B if Bt == B else _round_up(B, Bt)
    grid = (B_pad // Bt,)

    def pad_b(x):
        if B_pad == B:
            return x
        return jnp.pad(x, ((0, B_pad - B),) + ((0, 0),) * (x.ndim - 1))

    seq_p = pad_b(seq)
    encs_p = [pad_b(e) for e in encs]

    in_specs = [pl.BlockSpec((Bt, L, F), lambda b: (b, 0, 0))]
    for e in encs:
        in_specs.append(pl.BlockSpec((Bt, L, int(e.shape[-1])),
                                     lambda b: (b, 0, 0)))
    in_specs.append(pl.BlockSpec((1, Din), lambda b: (0, 0)))
    out_specs = pl.BlockSpec((Bt, F), lambda b: (b, 0))

    # Raise scoped VMEM only when the double-buffered working set might exceed
    # the smallest default (v5e 16 MiB); cap at 40 MiB on 64-MiB-VMEM chips.
    in_bytes = Bt * L * Din * itemsize
    out_bytes = Bt * F * itemsize
    interm = Bt * L * (F + 4) * 4                  # in-kernel f32 intermediates
    per_step = 2 * (in_bytes + out_bytes + Din * itemsize) + interm
    cp_kwargs = {}
    if per_step > (12 << 20):
        cap = (40 << 20) if vmem_phys <= (64 << 20) else (64 << 20)
        cp_kwargs["vmem_limit_bytes"] = int(min(cap, per_step + (8 << 20)))

    use_mxu = (L >= 128 and F >= 128)

    out = pl.pallas_call(
        _make_gqa_kernel(dims, use_mxu),
        out_shape=jax.ShapeDtypeStruct((B_pad, F), seq.dtype),
        grid_spec=pltpu.PrefetchScalarGridSpec(
            num_scalar_prefetch=0,
            grid=grid,
            in_specs=in_specs,
            out_specs=out_specs,
        ),
        compiler_params=pltpu.CompilerParams(
            dimension_semantics=("parallel",), **cp_kwargs),
    )(seq_p, *encs_p, w_q)

    return out[:B]


def _reference(seq, pos_enc, time_enc, weight, bias, query):
    """Pure-JAX reference matching the PyTorch forward (HIGHEST precision)."""
    parts = [seq] + [e for e in (pos_enc, time_enc) if e is not None]
    kseq = jnp.concatenate(parts, axis=-1)
    key = jnp.einsum("bld,kd->blk", kseq, weight,
                     precision=jax.lax.Precision.HIGHEST) + bias
    scores = jnp.sum(key * query, axis=-1)
    attn = jax.nn.softmax(scores, axis=-1)[..., None]
    return jnp.sum(attn * seq, axis=1)


if __name__ == "__main__":
    # Small deterministic setup.
    B, L, F, E = 4, 8, 16, 8
    d_model = 32
    input_dim = F + 2 * E  # concat of seq + pos_enc + time_enc

    key0 = jax.random.PRNGKey(0)
    ks = jax.random.split(key0, 6)
    seq = jax.random.normal(ks[0], (B, L, F), dtype=jnp.float32)
    pos_enc = jax.random.normal(ks[1], (B, L, E), dtype=jnp.float32)
    time_enc = jax.random.normal(ks[2], (B, L, E), dtype=jnp.float32)

    # Deterministic synthetic parameters (shapes from nn.Linear / Parameter).
    weight = jax.random.normal(ks[3], (d_model, input_dim), dtype=jnp.float32) * 0.1
    bias = jax.random.normal(ks[4], (d_model,), dtype=jnp.float32) * 0.1
    query = jax.random.normal(ks[5], (d_model,), dtype=jnp.float32)

    out = global_query_attention(seq, pos_enc, time_enc, weight, bias, query)
    out = jax.block_until_ready(out)
    ref = _reference(seq, pos_enc, time_enc, weight, bias, query)
    assert out.shape == (B, F)
    assert jnp.allclose(out, ref, atol=2e-3, rtol=2e-3), "mismatch vs reference"

    # Odd batch + explicit block_b exercises the pad-to-multiple path
    # (no trailing batch rows silently dropped).
    B2 = 3
    out2 = global_query_attention(seq[:B2], pos_enc[:B2], time_enc[:B2],
                                  weight, bias, query, block_b=8)
    out2 = jax.block_until_ready(out2)
    ref2 = _reference(seq[:B2], pos_enc[:B2], time_enc[:B2], weight, bias, query)
    assert out2.shape == (B2, F)
    assert jnp.allclose(out2, ref2, atol=2e-3, rtol=2e-3), "mismatch (padded batch)"

    # TODO(synk): dropout is declared in __init__ but never applied in forward;
    # `causality` and `return_att` are likewise not part of the computed output.
    print("KERNEL_OK")
</pallas_src>

<mosaic_0001>
module attributes {stable_mosaic.version = 11 : i64} {
  func.func @kernel(%arg0: i32, %arg1: memref<4x8x16xf32, #tpu.memory_space<vmem>>, %arg2: memref<4x8x8xf32, #tpu.memory_space<vmem>>, %arg3: memref<4x8x8xf32, #tpu.memory_space<vmem>>, %arg4: memref<1x32xf32, #tpu.memory_space<vmem>>, %arg5: memref<4x16xf32, #tpu.memory_space<vmem>>) attributes {dimension_semantics = [#tpu.dimension_semantics<parallel>], iteration_bounds = array<i64: 1>, scalar_prefetch = 0 : i64, scratch_operands = 0 : i64, tpu.core_type = #tpu.core_type<tc>, window_params = [{transform_indices = @transform_0, window_bounds = array<i64: 4, 8, 16>}, {transform_indices = @transform_1, window_bounds = array<i64: 4, 8, 8>}, {transform_indices = @transform_2, window_bounds = array<i64: 4, 8, 8>}, {pipeline_mode = #tpu.pipeline_mode<synchronous>, transform_indices = @transform_3, window_bounds = array<i64: 1, 32>}, {transform_indices = @transform_4, window_bounds = array<i64: 4, 16>}]} {
    %c0 = arith.constant 0 : index
    %c0_0 = arith.constant 0 : index
    %c0_1 = arith.constant 0 : index
    %0 = vector.load %arg1[%c0, %c0_0, %c0_1] : memref<4x8x16xf32, #tpu.memory_space<vmem>>, vector<4x8x16xf32>
    %c0_2 = arith.constant 0 : index
    %c0_3 = arith.constant 0 : index
    %1 = vector.load %arg4[%c0_2, %c0_3] : memref<1x32xf32, #tpu.memory_space<vmem>>, vector<1x16xf32>
    %2 = vector.shape_cast %1 : vector<1x16xf32> to vector<1x1x16xf32>
    %3 = vector.broadcast %2 : vector<1x1x16xf32> to vector<4x8x16xf32>
    %4 = arith.mulf %0, %3 : vector<4x8x16xf32>
    %cst = arith.constant dense<0.000000e+00> : vector<4x8xf32>
    %5 = vector.multi_reduction <add>, %4, %cst [2] : vector<4x8x16xf32> to vector<4x8xf32>
    %c0_4 = arith.constant 0 : index
    %c0_5 = arith.constant 0 : index
    %c0_6 = arith.constant 0 : index
    %6 = vector.load %arg2[%c0_4, %c0_5, %c0_6] : memref<4x8x8xf32, #tpu.memory_space<vmem>>, vector<4x8x8xf32>
    %c0_7 = arith.constant 0 : index
    %c16 = arith.constant 16 : index
    %7 = vector.load %arg4[%c0_7, %c16] : memref<1x32xf32, #tpu.memory_space<vmem>>, vector<1x8xf32>
    %8 = vector.shape_cast %7 : vector<1x8xf32> to vector<1x1x8xf32>
    %9 = vector.broadcast %8 : vector<1x1x8xf32> to vector<4x8x8xf32>
    %10 = arith.mulf %6, %9 : vector<4x8x8xf32>
    %cst_8 = arith.constant dense<0.000000e+00> : vector<4x8xf32>
    %11 = vector.multi_reduction <add>, %10, %cst_8 [2] : vector<4x8x8xf32> to vector<4x8xf32>
    %12 = arith.addf %5, %11 : vector<4x8xf32>
    %c0_9 = arith.constant 0 : index
    %c0_10 = arith.constant 0 : index
    %c0_11 = arith.constant 0 : index
    %13 = vector.load %arg3[%c0_9, %c0_10, %c0_11] : memref<4x8x8xf32, #tpu.memory_space<vmem>>, vector<4x8x8xf32>
    %c0_12 = arith.constant 0 : index
    %c24 = arith.constant 24 : index
    %14 = vector.load %arg4[%c0_12, %c24] : memref<1x32xf32, #tpu.memory_space<vmem>>, vector<1x8xf32>
    %15 = vector.shape_cast %14 : vector<1x8xf32> to vector<1x1x8xf32>
    %16 = vector.broadcast %15 : vector<1x1x8xf32> to vector<4x8x8xf32>
    %17 = arith.mulf %13, %16 : vector<4x8x8xf32>
    %cst_13 = arith.constant dense<0.000000e+00> : vector<4x8xf32>
    %18 = vector.multi_reduction <add>, %17, %cst_13 [2] : vector<4x8x8xf32> to vector<4x8xf32>
    %19 = arith.addf %12, %18 : vector<4x8xf32>
    %cst_14 = arith.constant dense<0xFF800000> : vector<4xf32>
    %20 = vector.multi_reduction <maximumf>, %19, %cst_14 [1] : vector<4x8xf32> to vector<4xf32>
    %21 = vector.shape_cast %20 : vector<4xf32> to vector<4x1xf32>
    %22 = vector.broadcast %21 : vector<4x1xf32> to vector<4x8xf32>
    %23 = arith.subf %19, %22 : vector<4x8xf32>
    %24 = math.exp %23 : vector<4x8xf32>
    %cst_15 = arith.constant dense<0.000000e+00> : vector<4xf32>
    %25 = vector.multi_reduction <add>, %24, %cst_15 [1] : vector<4x8xf32> to vector<4xf32>
    %26 = vector.shape_cast %25 : vector<4xf32> to vector<4x1xf32>
    %27 = vector.broadcast %26 : vector<4x1xf32> to vector<4x8xf32>
    %28 = arith.divf %24, %27 : vector<4x8xf32>
    %29 = vector.shape_cast %28 : vector<4x8xf32> to vector<4x8x1xf32>
    %30 = vector.broadcast %29 : vector<4x8x1xf32> to vector<4x8x16xf32>
    %31 = arith.mulf %30, %0 : vector<4x8x16xf32>
    %cst_16 = arith.constant dense<0.000000e+00> : vector<4x16xf32>
    %32 = vector.multi_reduction <add>, %31, %cst_16 [1] : vector<4x8x16xf32> to vector<4x16xf32>
    %c0_17 = arith.constant 0 : index
    %c0_18 = arith.constant 0 : index
    %33 = vector.load %arg5[%c0_17, %c0_18] : memref<4x16xf32, #tpu.memory_space<vmem>>, vector<4x16xf32>
    tpu.vector_store %arg5[%c0_17, %c0_18], %32 {strides = array<i32>} : memref<4x16xf32, #tpu.memory_space<vmem>>, vector<4x16xf32>,
    return
  }
  func.func @transform_0(%arg0: i32) -> (i32, i32, i32) {
    %c0_i32 = arith.constant 0 : i32
    %c0_i32_0 = arith.constant 0 : i32
    %c0_i32_1 = arith.constant 0 : i32
    return %arg0, %c0_i32, %c0_i32_0 : i32, i32, i32
  }
  func.func @transform_1(%arg0: i32) -> (i32, i32, i32) {
    %c0_i32 = arith.constant 0 : i32
    %c0_i32_0 = arith.constant 0 : i32
    %c0_i32_1 = arith.constant 0 : i32
    return %arg0, %c0_i32, %c0_i32_0 : i32, i32, i32
  }
  func.func @transform_2(%arg0: i32) -> (i32, i32, i32) {
    %c0_i32 = arith.constant 0 : i32
    %c0_i32_0 = arith.constant 0 : i32
    %c0_i32_1 = arith.constant 0 : i32
    return %arg0, %c0_i32, %c0_i32_0 : i32, i32, i32
  }
  func.func @transform_3(%arg0: i32) -> (i32, i32) {
    %c0_i32 = arith.constant 0 : i32
    %c0_i32_0 = arith.constant 0 : i32
    %c0_i32_1 = arith.constant 0 : i32
    return %c0_i32, %c0_i32_0 : i32, i32
  }
  func.func @transform_4(%arg0: i32) -> (i32, i32) {
    %c0_i32 = arith.constant 0 : i32
    %c0_i32_0 = arith.constant 0 : i32
    return %arg0, %c0_i32 : i32, i32
  }
}

</mosaic_0001>

<llo_original>
// kernel: tpu_custom_call.1
$region0: #{tpu_custom_call.1}
  #allocation0 [shape = 'u32[]', space=smem, size = 0x4, offset = 0x4, fixed_abs, tag = 'smem constant byte address 0x4 - core index']
  #allocation1 [shape = 'u32[144,128]{1,0:T(1,128)}', space=vmem, size = 0x12000, scoped, tag = 'internal scratch']
  %s0 = inlined_call_operand.hbm [shape: f32[4,8,16], index: 0, kind: input, shape index: {}]
  %s1 = inlined_call_operand.hbm [shape: f32[4,8,8], index: 1, kind: input, shape index: {}]
  %s2 = inlined_call_operand.hbm [shape: f32[4,8,8], index: 2, kind: input, shape index: {}]
  %s3 = inlined_call_operand.vmem [shape: f32[1,32], index: 3, kind: input, shape index: {}]
  %s4 = inlined_call_operand.hbm [shape: f32[4,16], index: 4, kind: output, shape index: {}]
  %s5 = sld [smem:[#allocation0]]
  $region38: #{tpu_custom_call.1} parent=0
    _
  %s7 = ssub.s32 1, %s5
  %s8 = scalar_select 0, %s7, %s5
  $region1: #{tpu_custom_call.1} parent=0
    #allocation2 [shape = 'u8[16384]{0}', space=vmem, size = 0x4000, scoped, tag = 'input window, operand 0, single buffered']
    #allocation3 [shape = 's32[1]{0}', space=sflag, size = 0x4, scoped, tag = 'scoped memory for tpu_custom_call.1']
    #allocation4 [shape = 's32[1]{0}', space=sflag, size = 0x4, scoped, tag = 'scoped memory for tpu_custom_call.1']
    #allocation5 [shape = 'u8[16384]{0}', space=vmem, size = 0x4000, scoped, tag = 'input window, operand 1, single buffered']
    #allocation6 [shape = 's32[1]{0}', space=sflag, size = 0x4, scoped, tag = 'scoped memory for tpu_custom_call.1']
    #allocation7 [shape = 'u8[16384]{0}', space=vmem, size = 0x4000, scoped, tag = 'input window, operand 2, single buffered']
    #allocation8 [shape = 'u8[2048]{0}', space=vmem, size = 0x800, scoped, tag = 'output window, operand 0, single buffered']
    %9 = vsyncpa [#allocation3], 0
    %10 = vsyncpa [#allocation6], 0
    %11 = vsyncpa [#allocation4], 0
    // Predicated region
    $region2: #{tpu_custom_call.1} parent=1 // pred_check
      _
    $region3: #{tpu_custom_call.1} parent=1 // pred_check_branch
      %13 = sbr.rel (0) target = $region5
    $region4: #{tpu_custom_call.1} parent=1 // pred_region
      %s15 = ssub.s32 512, 512
      %16 = vsyncadd [#allocation3], %s15
      %s17 = sshll.u32 [#allocation2], 4
      %s18 = int_to_ptr.vmem [resolvable:$true] %s17
      %23 = dma.hbm_to_vmem [thread:$0]  %s0, 512, %s18, [#allocation3], 128, 128, 8
    $region5: #{tpu_custom_call.1} parent=1 // pred_fallthru
      _
    // Predicated region
    $region6: #{tpu_custom_call.1} parent=1 // pred_check
      _
    $region7: #{tpu_custom_call.1} parent=1 // pred_check_branch
      %25 = sbr.rel (0) target = $region9
    $region8: #{tpu_custom_call.1} parent=1 // pred_region
      %s27 = ssub.s32 512, 512
      %28 = vsyncadd [#allocation6], %s27
      %s29 = sshll.u32 [#allocation5], 4
      %s30 = int_to_ptr.vmem [resolvable:$true] %s29
      %35 = dma.hbm_to_vmem [thread:$0]  %s1, 512, %s30, [#allocation6], 128, 128, 8
    $region9: #{tpu_custom_call.1} parent=1 // pred_fallthru
      _
    // Predicated region
    $region10: #{tpu_custom_call.1} parent=1 // pred_check
      _
    $region11: #{tpu_custom_call.1} parent=1 // pred_check_branch
      %37 = sbr.rel (0) target = $region13
    $region12: #{tpu_custom_call.1} parent=1 // pred_region
      %s39 = ssub.s32 512, 512
      %40 = vsyncadd [#allocation6], %s39
      %s41 = sshll.u32 [#allocation7], 4
      %s42 = int_to_ptr.vmem [resolvable:$true] %s41
      %47 = dma.hbm_to_vmem [thread:$0]  %s2, 512, %s42, [#allocation6], 128, 128, 8
    $region13: #{tpu_custom_call.1} parent=1 // pred_fallthru
      _
    // Predicated region
    $region14: #{tpu_custom_call.1} parent=1 // pred_check
      _
    $region15: #{tpu_custom_call.1} parent=1 // pred_check_branch
      %49 = sbr.rel (0) target = $region17
    $region16: #{tpu_custom_call.1} parent=1 // pred_region
      _
    $region17: #{tpu_custom_call.1} parent=1 // pred_fallthru
      _
    // Predicated region
    $region18: #{tpu_custom_call.1} parent=1 // pred_check
      _
    $region19: #{tpu_custom_call.1} parent=1 // pred_check_branch
      %51 = sbr.rel (0) target = $region21
    $region20: #{tpu_custom_call.1} parent=1 // pred_region
      %52 = dma.done [#allocation3], 512
    $region21: #{tpu_custom_call.1} parent=1 // pred_fallthru
      _
    // Predicated region
    $region22: #{tpu_custom_call.1} parent=1 // pred_check
      _
    $region23: #{tpu_custom_call.1} parent=1 // pred_check_branch
      %54 = sbr.rel (0) target = $region25
    $region24: #{tpu_custom_call.1} parent=1 // pred_region
      %55 = dma.done [#allocation6], 512
    $region25: #{tpu_custom_call.1} parent=1 // pred_fallthru
      _
    // Predicated region
    $region26: #{tpu_custom_call.1} parent=1 // pred_check
      _
    $region27: #{tpu_custom_call.1} parent=1 // pred_check_branch
      %57 = sbr.rel (0) target = $region29
    $region28: #{tpu_custom_call.1} parent=1 // pred_region
      %58 = dma.done [#allocation6], 512
    $region29: #{tpu_custom_call.1} parent=1 // pred_fallthru
      _
    %v59 = vld [vmem:[#allocation2] sm:$0xff]
    %v60 = vld [vmem:[#allocation2 + $0x8] sm:$0xff]
    %v61 = vld [vmem:[#allocation2 + $0x10] sm:$0xff]
    %v62 = vld [vmem:[#allocation2 + $0x18] sm:$0xff]
    %v63 = vld [vmem:[%s3] sm:$0x1]
    %v65 = vlaneseq
    %v66 = vshrl.u32 %v65, 7
    %v67 = vsub.s32 0, %v66
    %v68 = vrot.slane %v63, %v67
    %v70 = vmul.f32 %v59, %v68
    %v71 = vmul.f32 %v60, %v68
    %v72 = vmul.f32 %v61, %v68
    %v73 = vmul.f32 %v62, %v68
    %vm74 = vcmask 130048
    %v75 = vsel %vm74, %v70, 0.0
    %76 = vadd.xlane.f32.xlu0 %v75
    %v77 = vpop.xlane.xlu0 %76
    %v78 = vsel %vm74, %v71, 0.0
    %79 = vadd.xlane.f32.xlu0 %v78
    %v80 = vpop.xlane.xlu0 %79
    %v81 = vsel %vm74, %v72, 0.0
    %82 = vadd.xlane.f32.xlu0 %v81
    %v83 = vpop.xlane.xlu0 %82
    %v84 = vsel %vm74, %v73, 0.0
    %85 = vadd.xlane.f32.xlu0 %v84
    %v86 = vpop.xlane.xlu0 %85
    %v87 = vld [vmem:[#allocation5] sm:$0xff]
    %v88 = vld [vmem:[#allocation5 + $0x8] sm:$0xff]
    %v89 = vld [vmem:[#allocation5 + $0x10] sm:$0xff]
    %v90 = vld [vmem:[#allocation5 + $0x18] sm:$0xff]
    %91 = vrot.lane.b32.xlu0 %v68, 112
    %v92 = vpop.permute.xlu0 %91
    %v94 = vmul.f32 %v87, %v92
    %v95 = vmul.f32 %v88, %v92
    %v96 = vmul.f32 %v89, %v92
    %v97 = vmul.f32 %v90, %v92
    %vm98 = vcmask 64512
    %v99 = vsel %vm98, %v94, 0.0
    %100 = vadd.xlane.f32.xlu0 %v99
    %v101 = vpop.xlane.xlu0 %100
    %v102 = vsel %vm98, %v95, 0.0
    %103 = vadd.xlane.f32.xlu0 %v102
    %v104 = vpop.xlane.xlu0 %103
    %v105 = vsel %vm98, %v96, 0.0
    %106 = vadd.xlane.f32.xlu0 %v105
    %v107 = vpop.xlane.xlu0 %106
    %v108 = vsel %vm98, %v97, 0.0
    %109 = vadd.xlane.f32.xlu0 %v108
    %v110 = vpop.xlane.xlu0 %109
    %v111 = vadd.f32 %v77, %v101
    %v112 = vadd.f32 %v80, %v104
    %v113 = vadd.f32 %v83, %v107
    %v114 = vadd.f32 %v86, %v110
    %v115 = vld [vmem:[#allocation7] sm:$0xff]
    %v116 = vld [vmem:[#allocation7 + $0x8] sm:$0xff]
    %v117 = vld [vmem:[#allocation7 + $0x10] sm:$0xff]
    %v118 = vld [vmem:[#allocation7 + $0x18] sm:$0xff]
    %119 = vrot.lane.b32.xlu0 %v68, 104
    %v120 = vpop.permute.xlu0 %119
    %v122 = vmul.f32 %v115, %v120
    %v123 = vmul.f32 %v116, %v120
    %v124 = vmul.f32 %v117, %v120
    %v125 = vmul.f32 %v118, %v120
    %v126 = vsel %vm98, %v122, 0.0
    %127 = vadd.xlane.f32.xlu0 %v126
    %v128 = vpop.xlane.xlu0 %127
    %v129 = vsel %vm98, %v123, 0.0
    %130 = vadd.xlane.f32.xlu0 %v129
    %v131 = vpop.xlane.xlu0 %130
    %v132 = vsel %vm98, %v124, 0.0
    %133 = vadd.xlane.f32.xlu0 %v132
    %v134 = vpop.xlane.xlu0 %133
    %v135 = vsel %vm98, %v125, 0.0
    %136 = vadd.xlane.f32.xlu0 %v135
    %v137 = vpop.xlane.xlu0 %136
    %v138 = vadd.f32 %v111, %v128
    %v139 = vadd.f32 %v112, %v131
    %v140 = vadd.f32 %v113, %v134
    %v141 = vadd.f32 %v114, %v137
    %v146 = vlaneseq
    %v147 = vand.u32 %v146, 127
    %v148 = vlaneseq
    %v149 = vshrl.u32 %v148, 7
    %v150 = vsub.s32 %v147, %v149
    %v151 = vrot.slane %v138, %v150
    %v152 = vlaneseq
    %v153 = vshrl.u32 %v152, 7
    %v154 = vsub.s32 %v147, %v153
    %v155 = vrot.slane %v139, %v154
    %v156 = vlaneseq
    %v157 = vshrl.u32 %v156, 7
    %v158 = vsub.s32 %v147, %v157
    %v159 = vrot.slane %v140, %v158
    %v160 = vlaneseq
    %v161 = vshrl.u32 %v160, 7
    %v162 = vsub.s32 %v147, %v161
    %v163 = vrot.slane %v141, %v162
    %vm164 = vcmask 1041409
    %v165 = vsel %vm164, %v155, %v151
    %vm166 = vcmask 1042434
    %v167 = vsel %vm166, %v159, %v165
    %vm168 = vcmask 1043459
    %v169 = vsel %vm168, %v163, %v167
    %vm171 = vcmask 60416
    %v172 = vsel %vm171, %v169, -inf
    %173 = vmax.xlane.f32.xlu0 %v172
    %v174 = vpop.xlane.xlu0 %173
    %v176 = vlaneseq
    %v177 = vshrl.u32 %v176, 7
    %v178 = vsub.s32 0, %v177
    %v179 = vrot.slane %v174, %v178
    %v180 = vlaneseq
    %v181 = vshrl.u32 %v180, 7
    %v182 = vsub.s32 1, %v181
    %v183 = vrot.slane %v174, %v182
    %v184 = vlaneseq
    %v185 = vshrl.u32 %v184, 7
    %v186 = vsub.s32 2, %v185
    %v187 = vrot.slane %v174, %v186
    %v188 = vlaneseq
    %v189 = vshrl.u32 %v188, 7
    %v190 = vsub.s32 3, %v189
    %v191 = vrot.slane %v174, %v190
    %v196 = vsub.f32 %v138, %v179
    %v197 = vsub.f32 %v139, %v183
    %v198 = vsub.f32 %v140, %v187
    %v199 = vsub.f32 %v141, %v191
    %v200 = vmul.f32 %v196, 1.442695
    %v201 = vpow.pop %v200
    %v202 = vmul.f32 %v197, 1.442695
    %v203 = vpow.pop %v202
    %v204 = vmul.f32 %v198, 1.442695
    %v205 = vpow.pop %v204
    %v206 = vmul.f32 %v199, 1.442695
    %v207 = vpow.pop %v206
    %212 = vset.pattern.permute.xlu0 0
    %213 = vperm.xlu0 %212, %v201
    %v214 = vpop.permute.xlu0 %213
    %215 = vset.pattern.permute.xlu0 0
    %216 = vperm.xlu0 %215, %v203
    %v217 = vpop.permute.xlu0 %216
    %218 = vset.pattern.permute.xlu0 0
    %219 = vperm.xlu0 %218, %v205
    %v220 = vpop.permute.xlu0 %219
    %221 = vset.pattern.permute.xlu0 0
    %222 = vperm.xlu0 %221, %v207
    %v223 = vpop.permute.xlu0 %222
    %v224 = vlaneseq
    %v225 = vshrl.u32 %v224, 7
    %v226 = vsub.s32 %v147, %v225
    %v227 = vrot.slane %v214, %v226
    %v228 = vlaneseq
    %v229 = vshrl.u32 %v228, 7
    %v230 = vsub.s32 %v147, %v229
    %v231 = vrot.slane %v217, %v230
    %v232 = vlaneseq
    %v233 = vshrl.u32 %v232, 7
    %v234 = vsub.s32 %v147, %v233
    %v235 = vrot.slane %v220, %v234
    %v236 = vlaneseq
    %v237 = vshrl.u32 %v236, 7
    %v238 = vsub.s32 %v147, %v237
    %v239 = vrot.slane %v223, %v238
    %v240 = vsel %vm164, %v231, %v227
    %v241 = vsel %vm166, %v235, %v240
    %v242 = vsel %vm168, %v239, %v241
    %v244 = vsel %vm171, %v242, 0.0
    %245 = vadd.xlane.f32.xlu0 %v244
    %v246 = vpop.xlane.xlu0 %245
    %v248 = vlaneseq
    %v249 = vshrl.u32 %v248, 7
    %v250 = vsub.s32 0, %v249
    %v251 = vrot.slane %v246, %v250
    %v252 = vlaneseq
    %v253 = vshrl.u32 %v252, 7
    %v254 = vsub.s32 1, %v253
    %v255 = vrot.slane %v246, %v254
    %v256 = vlaneseq
    %v257 = vshrl.u32 %v256, 7
    %v258 = vsub.s32 2, %v257
    %v259 = vrot.slane %v246, %v258
    %v260 = vlaneseq
    %v261 = vshrl.u32 %v260, 7
    %v262 = vsub.s32 3, %v261
    %v263 = vrot.slane %v246, %v262
    %v268 = vrcp.pop %v251
    %v269 = vmul.f32 %v201, %v268
    %v270 = vrcp.pop %v255
    %v271 = vmul.f32 %v203, %v270
    %v272 = vrcp.pop %v259
    %v273 = vmul.f32 %v205, %v272
    %v274 = vrcp.pop %v263
    %v275 = vmul.f32 %v207, %v274
    %277 = vset.pattern.permute.xlu0 0
    %278 = vperm.xlu0 %277, %v269
    %v279 = vpop.permute.xlu0 %278
    %282 = vset.pattern.permute.xlu0 0
    %283 = vperm.xlu0 %282, %v271
    %v284 = vpop.permute.xlu0 %283
    %287 = vset.pattern.permute.xlu0 0
    %288 = vperm.xlu0 %287, %v273
    %v289 = vpop.permute.xlu0 %288
    %292 = vset.pattern.permute.xlu0 0
    %293 = vperm.xlu0 %292, %v275
    %v294 = vpop.permute.xlu0 %293
    %v296 = vmul.f32 %v279, %v59
    %v297 = vmul.f32 %v284, %v60
    %v298 = vmul.f32 %v289, %v61
    %v299 = vmul.f32 %v294, %v62
    %v300 = vsel %vm74, %v296, 0.0
    %v301 = vrot.slane %v300, 4
    %v302 = vadd.f32 %v300, %v301
    %v303 = vrot.slane %v302, 2
    %v304 = vadd.f32 %v302, %v303
    %v305 = vrot.slane %v304, 1
    %v306 = vadd.f32 %v304, %v305
    %v307 = vsel %vm74, %v297, 0.0
    %v308 = vrot.slane %v307, 4
    %v309 = vadd.f32 %v307, %v308
    %v310 = vrot.slane %v309, 2
    %v311 = vadd.f32 %v309, %v310
    %v312 = vrot.slane %v311, 1
    %v313 = vadd.f32 %v311, %v312
    %v314 = vsel %vm74, %v298, 0.0
    %v315 = vrot.slane %v314, 4
    %v316 = vadd.f32 %v314, %v315
    %v317 = vrot.slane %v316, 2
    %v318 = vadd.f32 %v316, %v317
    %v319 = vrot.slane %v318, 1
    %v320 = vadd.f32 %v318, %v319
    %v321 = vsel %vm74, %v299, 0.0
    %v322 = vrot.slane %v321, 4
    %v323 = vadd.f32 %v321, %v322
    %v324 = vrot.slane %v323, 2
    %v325 = vadd.f32 %v323, %v324
    %v326 = vrot.slane %v325, 1
    %v327 = vadd.f32 %v325, %v326
    %v332 = vsel %vm164, %v313, %v306
    %v333 = vsel %vm166, %v320, %v332
    %v334 = vsel %vm168, %v327, %v333
    %vm336 = vcmask 125952
    %337 = vst.msk [vmem:[#allocation8] sm:$0xf] %vm336, %v334
    // Predicated region
    $region30: #{tpu_custom_call.1} parent=1 // pred_check
      _
    $region31: #{tpu_custom_call.1} parent=1 // pred_check_branch
      %339 = sbr.rel (0) target = $region33
    $region32: #{tpu_custom_call.1} parent=1 // pred_region
      %s341 = ssub.s32 64, 64
      %342 = vsyncadd [#allocation4], %s341
      %s344 = sshll.u32 [#allocation8], 4
      %s345 = int_to_ptr.vmem [resolvable:$true] %s344
      %347 = dma.vmem_to_hbm [thread:$0]  %s345, 64, %s4, [#allocation4]
    $region33: #{tpu_custom_call.1} parent=1 // pred_fallthru
      _
    // Predicated region
    $region34: #{tpu_custom_call.1} parent=1 // pred_check
      _
    $region35: #{tpu_custom_call.1} parent=1 // pred_check_branch
      %349 = sbr.rel (0) target = $region37
    $region36: #{tpu_custom_call.1} parent=1 // pred_region
      %350 = dma.done [#allocation4], 64
    $region37: #{tpu_custom_call.1} parent=1 // pred_fallthru
      _
    %351 = vsyncpa [#allocation3], 1
    %352 = vsyncpa [#allocation6], 1
    %353 = vsyncpa [#allocation4], 1

</llo_original>
